<compile_context>
chip_gen: v7x
topology: tpu7x:2x2x1
jax: 0.10.0
libtpu: 0.0.40
codegen_flags: <defaults>
</compile_context>

<pallas_src>
import functools

import numpy as np
import jax
import jax.numpy as jnp
from jax.experimental import pallas as pl
from jax.experimental.pallas import tpu as pltpu


def _cdiv(a, b):
    return -(-a // b)


def _round_up(a, m):
    return _cdiv(a, m) * m


# ----------------------------------------------------------------------------
# kernel: one (row_tile, features) block per grid step
# ----------------------------------------------------------------------------
def _layernorm_kernel(x_ref, a_ref, b_ref, o_ref, *, eps, n_feat, use_mxu):
    x = x_ref[...].astype(jnp.float32)            # (TR, F) — upcast in-regs
    a = a_ref[...].astype(jnp.float32)            # (1, F)
    b = b_ref[...].astype(jnp.float32)            # (1, F)

    if use_mxu:
        # Row-sum on the MXU (idle in LayerNorm) instead of the XLU reduce
        # tree.  bf16 hi/lo split keeps ~f32 accuracy independent of the
        # default matmul precision: x == hi + lo to ~2^-17 relative.
        ones = jnp.ones((n_feat, 1), jnp.bfloat16)

        def rowsum(t):
            hi = t.astype(jnp.bfloat16)
            lo = (t - hi.astype(jnp.float32)).astype(jnp.bfloat16)
            s = jnp.dot(hi, ones, preferred_element_type=jnp.float32)
            s = s + jnp.dot(lo, ones, preferred_element_type=jnp.float32)
            return s                              # (TR, 1) f32
    else:
        def rowsum(t):
            return jnp.sum(t, axis=-1, keepdims=True)

    mean = rowsum(x) * (1.0 / n_feat)             # (TR, 1)
    xc = x - mean
    # torch.Tensor.std() is the UNBIASED estimator (divide by N-1); the
    # reference adds eps to std (not to var).
    var = rowsum(xc * xc) * (1.0 / max(n_feat - 1, 1))
    inv = pl.reciprocal(jnp.sqrt(var) + eps)      # exact; EUP slot, not VALU
    o_ref[...] = ((xc * inv) * a + b).astype(o_ref.dtype)


# ----------------------------------------------------------------------------
# wrapper
# ----------------------------------------------------------------------------
def layer_norm(x, a_2, b_2, *, eps=1e-6, target_block_bytes=1 << 20,
               use_mxu_reduce=True):
    """LayerNorm over the last dim of `x` (any leading shape, any float dtype)."""
    orig_shape = x.shape
    feat = orig_shape[-1]
    rows = int(np.prod(orig_shape[:-1])) if len(orig_shape) > 1 else 1

    # Pure reshapes (no pad, no cast, no slice) — no extra HBM copies.
    x2 = x.reshape(rows, feat)
    a2 = a_2.reshape(1, feat)
    b2 = b_2.reshape(1, feat)

    itemsize = jnp.dtype(x.dtype).itemsize
    if rows <= 8:
        tr = rows                                  # single block == full array
    else:
        # ~1 MiB of x per block, sublane-aligned.
        tr = max(8, (target_block_bytes // (feat * itemsize)) // 8 * 8)
        tr = min(tr, 4096)                         # VMEM headroom on all gens
        # Guarantee >= 2 grid steps so v7x can shard the parallel axis across
        # its 2 TensorCores (harmless on single-TC v5e/v6e).
        tr = min(tr, _round_up(_cdiv(rows, 2), 8))
        tr = max(tr, 8)

    grid = (_cdiv(rows, tr),)                      # ragged last block is fine

    kernel = functools.partial(
        _layernorm_kernel, eps=float(eps), n_feat=feat, use_mxu=use_mxu_reduce)

    out = pl.pallas_call(
        kernel,
        grid=grid,
        in_specs=[
            pl.BlockSpec((tr, feat), lambda i: (i, 0)),   # x row tile
            pl.BlockSpec((1, feat), lambda i: (0, 0)),    # a_2 (broadcast)
            pl.BlockSpec((1, feat), lambda i: (0, 0)),    # b_2 (broadcast)
        ],
        out_specs=pl.BlockSpec((tr, feat), lambda i: (i, 0)),
        out_shape=jax.ShapeDtypeStruct((rows, feat), x.dtype),
        compiler_params=pltpu.CompilerParams(
            dimension_semantics=("parallel",),            # row tiles independent
            vmem_limit_bytes=32 * 1024 * 1024,            # headroom, <= all gens
        ),
    )(x2, a2, b2)

    return out.reshape(orig_shape)


# ----------------------------------------------------------------------------
# test
# ----------------------------------------------------------------------------
if __name__ == "__main__":
    B, S, F = 2, 32, 128                           # features lane-dense
    key = jax.random.PRNGKey(0)
    kx, ka, kb = jax.random.split(key, 3)
    x = jax.random.normal(kx, (B, S, F), dtype=jnp.float32)
    a_2 = 1.0 + 0.1 * jax.random.normal(ka, (F,), dtype=jnp.float32)
    b_2 = 0.1 * jax.random.normal(kb, (F,), dtype=jnp.float32)

    fwd = jax.jit(layer_norm)
    y = jax.block_until_ready(fwd(x, a_2, b_2))

    # pure-JAX reference matching the PyTorch module exactly
    mean = x.mean(-1, keepdims=True)
    std = jnp.std(x, axis=-1, keepdims=True, ddof=1)   # unbiased, like torch
    y_ref = a_2 * (x - mean) / (std + 1e-6) + b_2

    assert y.shape == x.shape, y.shape
    assert y.dtype == x.dtype, y.dtype
    assert bool(jnp.all(jnp.isfinite(y)))
    np.testing.assert_allclose(np.asarray(y), np.asarray(y_ref),
                               rtol=1e-5, atol=1e-5)
    print("KERNEL_OK")
</pallas_src>

<mosaic_0001>
module attributes {stable_mosaic.version = 11 : i64} {
  func.func @_layernorm_kernel(%arg0: i32, %arg1: memref<32x128xf32, #tpu.memory_space<vmem>>, %arg2: memref<1x128xf32, #tpu.memory_space<vmem>>, %arg3: memref<1x128xf32, #tpu.memory_space<vmem>>, %arg4: memref<32x128xf32, #tpu.memory_space<vmem>>) attributes {dimension_semantics = [#tpu.dimension_semantics<parallel>], iteration_bounds = array<i64: 2>, scalar_prefetch = 0 : i64, scratch_operands = 0 : i64, tpu.core_type = #tpu.core_type<tc>, window_params = [{transform_indices = @transform_0, window_bounds = array<i64: 32, 128>}, {pipeline_mode = #tpu.pipeline_mode<synchronous>, transform_indices = @transform_1, window_bounds = array<i64: 1, 128>}, {pipeline_mode = #tpu.pipeline_mode<synchronous>, transform_indices = @transform_2, window_bounds = array<i64: 1, 128>}, {transform_indices = @transform_3, window_bounds = array<i64: 32, 128>}]} {
    %c0 = arith.constant 0 : index
    %c0_0 = arith.constant 0 : index
    %0 = vector.load %arg1[%c0, %c0_0] : memref<32x128xf32, #tpu.memory_space<vmem>>, vector<32x128xf32>
    %c0_1 = arith.constant 0 : index
    %c0_2 = arith.constant 0 : index
    %1 = vector.load %arg2[%c0_1, %c0_2] : memref<1x128xf32, #tpu.memory_space<vmem>>, vector<1x128xf32>
    %c0_3 = arith.constant 0 : index
    %c0_4 = arith.constant 0 : index
    %2 = vector.load %arg3[%c0_3, %c0_4] : memref<1x128xf32, #tpu.memory_space<vmem>>, vector<1x128xf32>
    %cst = arith.constant 1.000000e+00 : bf16
    %3 = vector.broadcast %cst : bf16 to vector<128x1xbf16>
    %4 = arith.truncf %0 : vector<32x128xf32> to vector<32x128xbf16>
    %5 = arith.extf %4 : vector<32x128xbf16> to vector<32x128xf32>
    %6 = arith.subf %0, %5 : vector<32x128xf32>
    %7 = arith.truncf %6 : vector<32x128xf32> to vector<32x128xbf16>
    %cst_5 = arith.constant dense<0.000000e+00> : vector<32x1xf32>
    %8 = tpu.matmul %4, %3, %cst_5 {dimension_numbers = #tpu.dot_dimension_numbers<[1], [0], [0], [1], [0, 0, 1, 1], [], []>} : vector<32x128xbf16>, vector<128x1xbf16>, vector<32x1xf32> -> vector<32x1xf32>
    %cst_6 = arith.constant dense<0.000000e+00> : vector<32x1xf32>
    %9 = tpu.matmul %7, %3, %cst_6 {dimension_numbers = #tpu.dot_dimension_numbers<[1], [0], [0], [1], [0, 0, 1, 1], [], []>} : vector<32x128xbf16>, vector<128x1xbf16>, vector<32x1xf32> -> vector<32x1xf32>
    %10 = arith.addf %8, %9 : vector<32x1xf32>
    %cst_7 = arith.constant 7.812500e-03 : f32
    %11 = vector.broadcast %cst_7 : f32 to vector<32x1xf32>
    %12 = arith.mulf %10, %11 : vector<32x1xf32>
    %13 = vector.broadcast %12 : vector<32x1xf32> to vector<32x128xf32>
    %14 = arith.subf %0, %13 : vector<32x128xf32>
    %15 = arith.mulf %14, %14 : vector<32x128xf32>
    %16 = arith.truncf %15 : vector<32x128xf32> to vector<32x128xbf16>
    %17 = arith.extf %16 : vector<32x128xbf16> to vector<32x128xf32>
    %18 = arith.subf %15, %17 : vector<32x128xf32>
    %19 = arith.truncf %18 : vector<32x128xf32> to vector<32x128xbf16>
    %cst_8 = arith.constant dense<0.000000e+00> : vector<32x1xf32>
    %20 = tpu.matmul %16, %3, %cst_8 {dimension_numbers = #tpu.dot_dimension_numbers<[1], [0], [0], [1], [0, 0, 1, 1], [], []>} : vector<32x128xbf16>, vector<128x1xbf16>, vector<32x1xf32> -> vector<32x1xf32>
    %cst_9 = arith.constant dense<0.000000e+00> : vector<32x1xf32>
    %21 = tpu.matmul %19, %3, %cst_9 {dimension_numbers = #tpu.dot_dimension_numbers<[1], [0], [0], [1], [0, 0, 1, 1], [], []>} : vector<32x128xbf16>, vector<128x1xbf16>, vector<32x1xf32> -> vector<32x1xf32>
    %22 = arith.addf %20, %21 : vector<32x1xf32>
    %cst_10 = arith.constant 0.00787401571 : f32
    %23 = vector.broadcast %cst_10 : f32 to vector<32x1xf32>
    %24 = arith.mulf %22, %23 : vector<32x1xf32>
    %25 = math.sqrt %24 : vector<32x1xf32>
    %cst_11 = arith.constant 9.99999997E-7 : f32
    %26 = vector.broadcast %cst_11 : f32 to vector<32x1xf32>
    %27 = arith.addf %25, %26 : vector<32x1xf32>
    %28 = tpu.reciprocal %27 : vector<32x1xf32> -> vector<32x1xf32>
    %29 = vector.broadcast %28 : vector<32x1xf32> to vector<32x128xf32>
    %30 = arith.mulf %14, %29 : vector<32x128xf32>
    %31 = vector.broadcast %1 : vector<1x128xf32> to vector<32x128xf32>
    %32 = arith.mulf %30, %31 : vector<32x128xf32>
    %33 = vector.broadcast %2 : vector<1x128xf32> to vector<32x128xf32>
    %34 = arith.addf %32, %33 : vector<32x128xf32>
    %c0_12 = arith.constant 0 : index
    %c0_13 = arith.constant 0 : index
    %35 = vector.load %arg4[%c0_12, %c0_13] : memref<32x128xf32, #tpu.memory_space<vmem>>, vector<32x128xf32>
    tpu.vector_store %arg4[%c0_12, %c0_13], %34 {strides = array<i32>} : memref<32x128xf32, #tpu.memory_space<vmem>>, vector<32x128xf32>,
    return
  }
  func.func @transform_0(%arg0: i32) -> (i32, i32) {
    %c0_i32 = arith.constant 0 : i32
    %c0_i32_0 = arith.constant 0 : i32
    return %arg0, %c0_i32 : i32, i32
  }
  func.func @transform_1(%arg0: i32) -> (i32, i32) {
    %c0_i32 = arith.constant 0 : i32
    %c0_i32_0 = arith.constant 0 : i32
    %c0_i32_1 = arith.constant 0 : i32
    return %c0_i32, %c0_i32_0 : i32, i32
  }
  func.func @transform_2(%arg0: i32) -> (i32, i32) {
    %c0_i32 = arith.constant 0 : i32
    %c0_i32_0 = arith.constant 0 : i32
    %c0_i32_1 = arith.constant 0 : i32
    return %c0_i32, %c0_i32_0 : i32, i32
  }
  func.func @transform_3(%arg0: i32) -> (i32, i32) {
    %c0_i32 = arith.constant 0 : i32
    %c0_i32_0 = arith.constant 0 : i32
    return %arg0, %c0_i32 : i32, i32
  }
}

</mosaic_0001>

<llo_original>
// kernel: layer_norm.1
$region0: #{layer_norm.1}
  #allocation0 [shape = 'u32[]', space=smem, size = 0x4, offset = 0x4, fixed_abs, tag = 'smem constant byte address 0x4 - core index']
  #allocation1 [shape = 'u32[144,128]{1,0:T(1,128)}', space=vmem, size = 0x12000, scoped, tag = 'internal scratch']
  %s0 = inlined_call_operand.hbm [shape: f32[64,128], index: 0, kind: input, shape index: {}]
  %s1 = inlined_call_operand.vmem [shape: f32[1,128], index: 1, kind: input, shape index: {}]
  %s2 = inlined_call_operand.vmem [shape: f32[1,128], index: 2, kind: input, shape index: {}]
  %s3 = inlined_call_operand.hbm [shape: f32[64,128], index: 3, kind: output, shape index: {}]
  %s4 = sld [smem:[#allocation0]]
  $region49: #{layer_norm.1} parent=0
    _
  %s6 = ssub.s32 1, %s4
  %s7 = scalar_select 0, %s6, %s4
  $region1: #{layer_norm.1} parent=0
    #allocation2 [shape = 'u8[32768]{0}', space=vmem, size = 0x8000, scoped, tag = 'input window, operand 0']
    #allocation3 [shape = 's32[2]{0}', space=sflag, size = 0x8, scoped, tag = 'scoped memory for layer_norm.1']
    #allocation4 [shape = 's32[2]{0}', space=sflag, size = 0x8, scoped, tag = 'scoped memory for layer_norm.1']
    #allocation5 [shape = 'u8[32768]{0}', space=vmem, size = 0x8000, scoped, tag = 'output window, operand 0']
    %8 = vsyncpa [#allocation3], 0
    %s9 = scalar_lea.sflag [#allocation3], 1
    %10 = vsyncpa %s9, 0
    %11 = vsyncpa [#allocation4], 0
    %s12 = scalar_lea.sflag [#allocation4], 1
    %13 = vsyncpa %s12, 0
    loop: start=0, step=1, limit=4
    $region2: #{layer_norm.1} parent=1 // loop_pre_header
      _
    $region3: #{layer_norm.1} parent=1 // loop_header
      %s15 = sphi 0, %s19
      %p16 = scmp.ge.s32.totalorder %s15, 4
      %s25 = sphi 0, %s27
      %s28 = sphi 0, %s25
      %s29 = sphi 0, %s28
      %s45 = sphi 0, %s29
      %s49 = sphi 0, %s49
      %s51 = sphi 0, %s49
      %s52 = sphi 0, %s51
      %s66 = sphi 0, %s52
      %s70 = sphi 0, %s70
      %s72 = sphi 0, %s70
      %s73 = sphi 0, %s72
      %s87 = sphi 0, %s73
      %s93 = sphi 0, %s95
      %s96 = sphi 0, %s93
      %s97 = sphi 0, %s96
      %s113 = sphi 0, %s97
    $region4: #{layer_norm.1} parent=1 // loop_header_branch
      %18 = sbr.rel (%p16) target = $region8
    $region5: #{layer_norm.1} parent=1 // loop_body
      %s20 = ssub.s32 %s15, 1
      %s21 = ssub.s32 %s15, 2
      %s22 = sadd.s32 %s15, 1
      %s23 = ssub.s32 %s15, %s22
      %p24 = scmp.eq.s32.totalorder %s23, 0
      %s26 = sadd.s32 %s25, 1
      %s27 = scalar_select %p24, %s25, %s26
      %p30 = pneg %p24
      %p31 = scmp.eq.s32.totalorder %s15, 1
      %p32 = por %p30, %p31
      %p33 = scmp.ne.s32.totalorder %s25, %s28
      %p34 = scmp.eq.s32.totalorder %s15, 0
      %p35 = por %p33, %p34
      %p36 = scmp.ne.s32.totalorder %s25, %s28
      %p37 = scmp.eq.s32.totalorder %s20, 1
      %p38 = por %p36, %p37
      %p39 = scmp.ne.s32.totalorder %s28, %s29
      %p40 = scmp.eq.s32.totalorder %s20, 0
      %p41 = por %p39, %p40
      %p42 = scmp.ne.s32.totalorder %s28, %s29
      %p43 = scmp.eq.s32.totalorder %s21, 1
      %p44 = por %p42, %p43
      %p46 = scmp.ne.s32.totalorder %s29, %s45
      %p47 = scmp.eq.s32.totalorder %s21, 0
      %p48 = por %p46, %p47
      %s50 = sadd.s32 %s49, 1
      %p53 = scmp.eq.s32.totalorder %s15, 1
      %p54 = scmp.ne.s32.totalorder %s49, %s51
      %p55 = scmp.eq.s32.totalorder %s15, 0
      %p56 = por %p54, %p55
      %p57 = scmp.ne.s32.totalorder %s49, %s51
      %p58 = scmp.eq.s32.totalorder %s20, 1
      %p59 = por %p57, %p58
      %p60 = scmp.ne.s32.totalorder %s51, %s52
      %p61 = scmp.eq.s32.totalorder %s20, 0
      %p62 = por %p60, %p61
      %p63 = scmp.ne.s32.totalorder %s51, %s52
      %p64 = scmp.eq.s32.totalorder %s21, 1
      %p65 = por %p63, %p64
      %p67 = scmp.ne.s32.totalorder %s52, %s66
      %p68 = scmp.eq.s32.totalorder %s21, 0
      %p69 = por %p67, %p68
      %s71 = sadd.s32 %s70, 1
      %p74 = scmp.eq.s32.totalorder %s15, 1
      %p75 = scmp.ne.s32.totalorder %s70, %s72
      %p76 = scmp.eq.s32.totalorder %s15, 0
      %p77 = por %p75, %p76
      %p78 = scmp.ne.s32.totalorder %s70, %s72
      %p79 = scmp.eq.s32.totalorder %s20, 1
      %p80 = por %p78, %p79
      %p81 = scmp.ne.s32.totalorder %s72, %s73
      %p82 = scmp.eq.s32.totalorder %s20, 0
      %p83 = por %p81, %p82
      %p84 = scmp.ne.s32.totalorder %s72, %s73
      %p85 = scmp.eq.s32.totalorder %s21, 1
      %p86 = por %p84, %p85
      %p88 = scmp.ne.s32.totalorder %s73, %s87
      %p89 = scmp.eq.s32.totalorder %s21, 0
      %p90 = por %p88, %p89
      %s91 = ssub.s32 %s15, %s22
      %p92 = scmp.eq.s32.totalorder %s91, 0
      %s94 = sadd.s32 %s93, 1
      %s95 = scalar_select %p92, %s93, %s94
      %p98 = pneg %p92
      %p99 = scmp.eq.s32.totalorder %s15, 1
      %p100 = por %p98, %p99
      %p101 = scmp.ne.s32.totalorder %s93, %s96
      %p102 = scmp.eq.s32.totalorder %s15, 0
      %p103 = por %p101, %p102
      %p104 = scmp.ne.s32.totalorder %s93, %s96
      %p105 = scmp.eq.s32.totalorder %s20, 1
      %p106 = por %p104, %p105
      %p107 = scmp.ne.s32.totalorder %s96, %s97
      %p108 = scmp.eq.s32.totalorder %s20, 0
      %p109 = por %p107, %p108
      %p110 = scmp.ne.s32.totalorder %s96, %s97
      %p111 = scmp.eq.s32.totalorder %s21, 1
      %p112 = por %p110, %p111
      %p114 = scmp.ne.s32.totalorder %s97, %s113
      %p115 = scmp.eq.s32.totalorder %s21, 0
      %p116 = por %p114, %p115
      %p117 = scmp.le.s32.totalorder 1, %s15
      %p118 = scmp.lt.s32.totalorder %s15, 3
      %p119 = pnand %p117, %p118
      %p120 = pneg %p119
      // Predicated region
      $region9: #{layer_norm.1} parent=5 // pred_check
        _
      $region10: #{layer_norm.1} parent=5 // pred_check_branch
        %122 = sbr.rel (%p119) target = $region12
      $region11: #{layer_norm.1} parent=5 // pred_region
        %s123 = ssub.s32 %s15, 1
        // Predicated region
        $region13: #{layer_norm.1} parent=11 // pred_check
          %p124 = pneg %p62
        $region14: #{layer_norm.1} parent=11 // pred_check_branch
          %126 = sbr.rel (%p124) target = $region16
        $region15: #{layer_norm.1} parent=11 // pred_region
          _
        $region16: #{layer_norm.1} parent=11 // pred_fallthru
          _
        // Predicated region
        $region17: #{layer_norm.1} parent=11 // pred_check
          %p127 = pneg %p83
        $region18: #{layer_norm.1} parent=11 // pred_check_branch
          %129 = sbr.rel (%p127) target = $region20
        $region19: #{layer_norm.1} parent=11 // pred_region
          _
        $region20: #{layer_norm.1} parent=11 // pred_fallthru
          _
      $region12: #{layer_norm.1} parent=5 // pred_fallthru
        _
      %p130 = scmp.lt.s32.totalorder %s15, 2
      // Predicated region
      $region21: #{layer_norm.1} parent=5 // pred_check
        %p131 = pneg %p130
      $region22: #{layer_norm.1} parent=5 // pred_check_branch
        %133 = sbr.rel (%p131) target = $region24
      $region23: #{layer_norm.1} parent=5 // pred_region
        // Predicated region
        $region25: #{layer_norm.1} parent=23 // pred_check
          %p134 = pneg %p35
        $region26: #{layer_norm.1} parent=23 // pred_check_branch
          %136 = sbr.rel (%p134) target = $region28
        $region27: #{layer_norm.1} parent=23 // pred_region
          %s137 = sand.u32 %s25, 1
          %s138 = scalar_lea.sflag [#allocation3], %s137
          %s139 = sand.u32 %s25, 1
          %s140 = smul.addr %s139, 32
          %s141 = scalar_lea.vmem [#allocation2], %s140
          %s142 = smul.u32 4, %s15
          %s144 = ssub.s32 512, 512
          %145 = vsyncadd %s138, %s144
          %s146 = smul.addr %s142, 128
          %s147 = scalar_lea.hbm %s0, %s146
          %s148 = sshll.u32 %s141, 4
          %s149 = int_to_ptr.vmem [resolvable:$true] %s148
          %154 = dma.hbm_to_vmem [thread:$0]  %s147, 512, %s149, %s138, 128, 128, 8
        $region28: #{layer_norm.1} parent=23 // pred_fallthru
          _
      $region24: #{layer_norm.1} parent=5 // pred_fallthru
        _
      %p155 = scmp.le.s32.totalorder 1, %s15
      %p156 = scmp.lt.s32.totalorder %s15, 3
      %p157 = pnand %p155, %p156
      %p158 = pneg %p157
      // Predicated region
      $region29: #{layer_norm.1} parent=5 // pred_check
        _
      $region30: #{layer_norm.1} parent=5 // pred_check_branch
        %160 = sbr.rel (%p157) target = $region32
      $region31: #{layer_norm.1} parent=5 // pred_region
        %s161 = ssub.s32 %s15, 1
        %s162 = sand.u32 %s28, 1
        %s163 = scalar_lea.sflag [#allocation3], %s162
        %s164 = sand.u32 %s28, 1
        %s165 = smul.addr %s164, 32
        %s166 = scalar_lea.vmem [#allocation2], %s165
        // Predicated region
        $region33: #{layer_norm.1} parent=31 // pred_check
          %p167 = pneg %p41
        $region34: #{layer_norm.1} parent=31 // pred_check_branch
          %169 = sbr.rel (%p167) target = $region36
        $region35: #{layer_norm.1} parent=31 // pred_region
          %170 = dma.done %s163, 512
        $region36: #{layer_norm.1} parent=31 // pred_fallthru
          _
        %s171 = sand.u32 %s28, 1
        %s172 = scalar_lea.sflag [#allocation3], %s171
        %s173 = sand.u32 %s28, 1
        %s174 = smul.addr %s173, 32
        %s175 = scalar_lea.vmem [#allocation2], %s174
        %p176 = pneg %p41
        %p177 = pneg %p38
        %p178 = pneg %p62
        %p179 = pneg %p59
        %p180 = pneg %p83
        %p181 = pneg %p80
        %p182 = pneg %p109
        %p183 = pneg %p106
        %s184 = sand.u32 %s96, 1
        %s185 = scalar_lea.sflag [#allocation4], %s184
        %s186 = sand.u32 %s96, 1
        %s187 = smul.addr %s186, 32
        %s188 = scalar_lea.vmem [#allocation5], %s187
        %s189 = smul.u32 4, %s20
        %s190 = smul.u32 4, %s20
        %v193 = vld [vmem:[%s166] sm:$0xff]
        %v194 = vld [vmem:[%s166 + $0x8] sm:$0xff]
        %v195 = vld [vmem:[%s166 + $0x10] sm:$0xff]
        %v196 = vld [vmem:[%s166 + $0x18] sm:$0xff]
        %v197 = vld [vmem:[%s1] sm:$0x1]
        %v198 = vld [vmem:[%s2] sm:$0x1]
        %v199 = vpack.c.bf16 %v194, %v193
        %v200 = vpack.c.bf16 %v196, %v195
        %v201 = vunpack.c.l.bf16 %v199
        %v202 = vunpack.c.h.bf16 %v199
        %v203 = vunpack.c.l.bf16 %v200
        %v204 = vunpack.c.h.bf16 %v200
        %v205 = vsub.f32 %v193, %v201
        %v206 = vsub.f32 %v194, %v202
        %v207 = vsub.f32 %v195, %v203
        %v208 = vsub.f32 %v196, %v204
        %v209 = vpack.c.bf16 %v206, %v205
        %v210 = vpack.c.bf16 %v208, %v207
        %211 = vmatprep.subr.bf16.mxu0 0
        %212 = vmatpush1.bf16.msra.mxu0 1065369472
        %213 = vmatprep.subr.bf16.mxu0 0
        %214 = vmatpush1.bf16.msra.mxu0 1065369472
        %215 = vmatprep.subr.bf16.mxu0 0
        %216 = vmatpush1.bf16.msra.mxu0 1065369472
        %217 = vmatprep.subr.bf16.mxu0 0
        %218 = vmatpush1.bf16.msra.mxu0 1065369472
        %219 = vmatprep.subr.bf16.mxu0 0
        %220 = vmatpush1.bf16.msra.mxu0 1065369472
        %221 = vmatprep.subr.bf16.mxu0 0
        %222 = vmatpush1.bf16.msra.mxu0 1065369472
        %223 = vmatprep.subr.bf16.mxu0 0
        %224 = vmatpush1.bf16.msra.mxu0 1065369472
        %225 = vmatprep.subr.bf16.mxu0 0
        %226 = vmatpush1.bf16.msra.mxu0 1065369472
        %227 = vmatprep.subr.bf16.mxu0 0
        %228 = vmatpush1.bf16.msra.mxu0 0
        %229 = vmatprep.subr.bf16.mxu0 0
        %230 = vmatpush1.bf16.msra.mxu0 0
        %231 = vmatprep.subr.bf16.mxu0 0
        %232 = vmatpush1.bf16.msra.mxu0 0
        %233 = vmatprep.subr.bf16.mxu0 0
        %234 = vmatpush1.bf16.msra.mxu0 0
        %235 = vmatprep.subr.bf16.mxu0 0
        %236 = vmatpush1.bf16.msra.mxu0 0
        %237 = vmatprep.subr.bf16.mxu0 0
        %238 = vmatpush1.bf16.msra.mxu0 0
        %239 = vmatprep.subr.bf16.mxu0 0
        %240 = vmatpush1.bf16.msra.mxu0 0
        %241 = vmatprep.subr.bf16.mxu0 0
        %242 = vmatpush1.bf16.msra.mxu0 0
        %243 = vmatprep.mubr.bf16.mxu0 0
        %244 = vmatmul.mubr.bf16.gmra.mrb[0].mxu0 %v209
        %v245 = vpop.f32.mrb[0].mxu0
        %v246 = vadd.f32 0.0, %v245
        %v247 = vpop.f32.mrb[0].mxu0
        %v248 = vpop.f32.mrb[0].mxu0
        %v249 = vadd.f32 0.0, %v248
        %v250 = vpop.f32.mrb[0].mxu0
        %251 = vmatprep.mubr.bf16.mxu0 0
        %252 = vmatmul.mubr.bf16.gmra.mrb[0].mxu0 %v210
        %v253 = vpop.f32.mrb[0].mxu0
        %v254 = vadd.f32 0.0, %v253
        %v255 = vpop.f32.mrb[0].mxu0
        %v256 = vpop.f32.mrb[0].mxu0
        %v257 = vadd.f32 0.0, %v256
        %v258 = vpop.f32.mrb[0].mxu0
        %259 = vdwg.mxu0
        %260 = vmatprep.subr.bf16.mxu0 0
        %261 = vmatpush1.bf16.msra.mxu0 1065369472
        %262 = vmatprep.subr.bf16.mxu0 0
        %263 = vmatpush1.bf16.msra.mxu0 1065369472
        %264 = vmatprep.subr.bf16.mxu0 0
        %265 = vmatpush1.bf16.msra.mxu0 1065369472
        %266 = vmatprep.subr.bf16.mxu0 0
        %267 = vmatpush1.bf16.msra.mxu0 1065369472
        %268 = vmatprep.subr.bf16.mxu0 0
        %269 = vmatpush1.bf16.msra.mxu0 1065369472
        %270 = vmatprep.subr.bf16.mxu0 0
        %271 = vmatpush1.bf16.msra.mxu0 1065369472
        %272 = vmatprep.subr.bf16.mxu0 0
        %273 = vmatpush1.bf16.msra.mxu0 1065369472
        %274 = vmatprep.subr.bf16.mxu0 0
        %275 = vmatpush1.bf16.msra.mxu0 1065369472
        %276 = vmatprep.subr.bf16.mxu0 0
        %277 = vmatpush1.bf16.msra.mxu0 0
        %278 = vmatprep.subr.bf16.mxu0 0
        %279 = vmatpush1.bf16.msra.mxu0 0
        %280 = vmatprep.subr.bf16.mxu0 0
        %281 = vmatpush1.bf16.msra.mxu0 0
        %282 = vmatprep.subr.bf16.mxu0 0
        %283 = vmatpush1.bf16.msra.mxu0 0
        %284 = vmatprep.subr.bf16.mxu0 0
        %285 = vmatpush1.bf16.msra.mxu0 0
        %286 = vmatprep.subr.bf16.mxu0 0
        %287 = vmatpush1.bf16.msra.mxu0 0
        %288 = vmatprep.subr.bf16.mxu0 0
        %289 = vmatpush1.bf16.msra.mxu0 0
        %290 = vmatprep.subr.bf16.mxu0 0
        %291 = vmatpush1.bf16.msra.mxu0 0
        %292 = vmatprep.mubr.bf16.mxu0 0
        %293 = vmatmul.mubr.bf16.gmra.mrb[0].mxu0 %v199
        %v294 = vpop.f32.mrb[0].mxu0
        %v295 = vadd.f32 %v246, %v294
        %v296 = vpop.f32.mrb[0].mxu0
        %v297 = vpop.f32.mrb[0].mxu0
        %v298 = vadd.f32 %v249, %v297
        %v299 = vpop.f32.mrb[0].mxu0
        %300 = vmatprep.mubr.bf16.mxu0 0
        %301 = vmatmul.mubr.bf16.gmra.mrb[0].mxu0 %v200
        %v302 = vpop.f32.mrb[0].mxu0
        %v303 = vadd.f32 %v254, %v302
        %v304 = vpop.f32.mrb[0].mxu0
        %v305 = vpop.f32.mrb[0].mxu0
        %v306 = vadd.f32 %v257, %v305
        %v307 = vpop.f32.mrb[0].mxu0
        %308 = vdwg.mxu0
        %v309 = vmul.f32 %v295, 0.0078125
        %v310 = vmul.f32 %v298, 0.0078125
        %v311 = vmul.f32 %v303, 0.0078125
        %v312 = vmul.f32 %v306, 0.0078125
        %314 = vset.pattern.permute.xlu0 0
        %315 = vperm.xlu0 %314, %v309
        %v316 = vpop.permute.xlu0 %315
        %319 = vset.pattern.permute.xlu0 0
        %320 = vperm.xlu0 %319, %v310
        %v321 = vpop.permute.xlu0 %320
        %324 = vset.pattern.permute.xlu0 0
        %325 = vperm.xlu0 %324, %v311
        %v326 = vpop.permute.xlu0 %325
        %329 = vset.pattern.permute.xlu0 0
        %330 = vperm.xlu0 %329, %v312
        %v331 = vpop.permute.xlu0 %330
        %v333 = vsub.f32 %v193, %v316
        %v334 = vsub.f32 %v194, %v321
        %v335 = vsub.f32 %v195, %v326
        %v336 = vsub.f32 %v196, %v331
        %v337 = vmul.f32 %v333, %v333
        %v338 = vmul.f32 %v334, %v334
        %v339 = vmul.f32 %v335, %v335
        %v340 = vmul.f32 %v336, %v336
        %v341 = vpack.c.bf16 %v338, %v337
        %v342 = vpack.c.bf16 %v340, %v339
        %v343 = vunpack.c.l.bf16 %v341
        %v344 = vunpack.c.h.bf16 %v341
        %v345 = vunpack.c.l.bf16 %v342
        %v346 = vunpack.c.h.bf16 %v342
        %v347 = vsub.f32 %v337, %v343
        %v348 = vsub.f32 %v338, %v344
        %v349 = vsub.f32 %v339, %v345
        %v350 = vsub.f32 %v340, %v346
        %v351 = vpack.c.bf16 %v348, %v347
        %v352 = vpack.c.bf16 %v350, %v349
        %353 = vmatprep.subr.bf16.mxu0 0
        %354 = vmatpush1.bf16.msra.mxu0 1065369472
        %355 = vmatprep.subr.bf16.mxu0 0
        %356 = vmatpush1.bf16.msra.mxu0 1065369472
        %357 = vmatprep.subr.bf16.mxu0 0
        %358 = vmatpush1.bf16.msra.mxu0 1065369472
        %359 = vmatprep.subr.bf16.mxu0 0
        %360 = vmatpush1.bf16.msra.mxu0 1065369472
        %361 = vmatprep.subr.bf16.mxu0 0
        %362 = vmatpush1.bf16.msra.mxu0 1065369472
        %363 = vmatprep.subr.bf16.mxu0 0
        %364 = vmatpush1.bf16.msra.mxu0 1065369472
        %365 = vmatprep.subr.bf16.mxu0 0
        %366 = vmatpush1.bf16.msra.mxu0 1065369472
        %367 = vmatprep.subr.bf16.mxu0 0
        %368 = vmatpush1.bf16.msra.mxu0 1065369472
        %369 = vmatprep.subr.bf16.mxu0 0
        %370 = vmatpush1.bf16.msra.mxu0 0
        %371 = vmatprep.subr.bf16.mxu0 0
        %372 = vmatpush1.bf16.msra.mxu0 0
        %373 = vmatprep.subr.bf16.mxu0 0
        %374 = vmatpush1.bf16.msra.mxu0 0
        %375 = vmatprep.subr.bf16.mxu0 0
        %376 = vmatpush1.bf16.msra.mxu0 0
        %377 = vmatprep.subr.bf16.mxu0 0
        %378 = vmatpush1.bf16.msra.mxu0 0
        %379 = vmatprep.subr.bf16.mxu0 0
        %380 = vmatpush1.bf16.msra.mxu0 0
        %381 = vmatprep.subr.bf16.mxu0 0
        %382 = vmatpush1.bf16.msra.mxu0 0
        %383 = vmatprep.subr.bf16.mxu0 0
        %384 = vmatpush1.bf16.msra.mxu0 0
        %385 = vmatprep.mubr.bf16.mxu0 0
        %386 = vmatmul.mubr.bf16.gmra.mrb[0].mxu0 %v351
        %v387 = vpop.f32.mrb[0].mxu0
        %v388 = vadd.f32 0.0, %v387
        %v389 = vpop.f32.mrb[0].mxu0
        %v390 = vpop.f32.mrb[0].mxu0
        %v391 = vadd.f32 0.0, %v390
        %v392 = vpop.f32.mrb[0].mxu0
        %393 = vmatprep.mubr.bf16.mxu0 0
        %394 = vmatmul.mubr.bf16.gmra.mrb[0].mxu0 %v352
        %v395 = vpop.f32.mrb[0].mxu0
        %v396 = vadd.f32 0.0, %v395
        %v397 = vpop.f32.mrb[0].mxu0
        %v398 = vpop.f32.mrb[0].mxu0
        %v399 = vadd.f32 0.0, %v398
        %v400 = vpop.f32.mrb[0].mxu0
        %401 = vdwg.mxu0
        %402 = vmatprep.subr.bf16.mxu0 0
        %403 = vmatpush1.bf16.msra.mxu0 1065369472
        %404 = vmatprep.subr.bf16.mxu0 0
        %405 = vmatpush1.bf16.msra.mxu0 1065369472
        %406 = vmatprep.subr.bf16.mxu0 0
        %407 = vmatpush1.bf16.msra.mxu0 1065369472
        %408 = vmatprep.subr.bf16.mxu0 0
        %409 = vmatpush1.bf16.msra.mxu0 1065369472
        %410 = vmatprep.subr.bf16.mxu0 0
        %411 = vmatpush1.bf16.msra.mxu0 1065369472
        %412 = vmatprep.subr.bf16.mxu0 0
        %413 = vmatpush1.bf16.msra.mxu0 1065369472
        %414 = vmatprep.subr.bf16.mxu0 0
        %415 = vmatpush1.bf16.msra.mxu0 1065369472
        %416 = vmatprep.subr.bf16.mxu0 0
        %417 = vmatpush1.bf16.msra.mxu0 1065369472
        %418 = vmatprep.subr.bf16.mxu0 0
        %419 = vmatpush1.bf16.msra.mxu0 0
        %420 = vmatprep.subr.bf16.mxu0 0
        %421 = vmatpush1.bf16.msra.mxu0 0
        %422 = vmatprep.subr.bf16.mxu0 0
        %423 = vmatpush1.bf16.msra.mxu0 0
        %424 = vmatprep.subr.bf16.mxu0 0
        %425 = vmatpush1.bf16.msra.mxu0 0
        %426 = vmatprep.subr.bf16.mxu0 0
        %427 = vmatpush1.bf16.msra.mxu0 0
        %428 = vmatprep.subr.bf16.mxu0 0
        %429 = vmatpush1.bf16.msra.mxu0 0
        %430 = vmatprep.subr.bf16.mxu0 0
        %431 = vmatpush1.bf16.msra.mxu0 0
        %432 = vmatprep.subr.bf16.mxu0 0
        %433 = vmatpush1.bf16.msra.mxu0 0
        %434 = vmatprep.mubr.bf16.mxu0 0
        %435 = vmatmul.mubr.bf16.gmra.mrb[0].mxu0 %v341
        %v436 = vpop.f32.mrb[0].mxu0
        %v437 = vadd.f32 %v388, %v436
        %v438 = vpop.f32.mrb[0].mxu0
        %v439 = vpop.f32.mrb[0].mxu0
        %v440 = vadd.f32 %v391, %v439
        %v441 = vpop.f32.mrb[0].mxu0
        %442 = vmatprep.mubr.bf16.mxu0 0
        %443 = vmatmul.mubr.bf16.gmra.mrb[0].mxu0 %v342
        %v444 = vpop.f32.mrb[0].mxu0
        %v445 = vadd.f32 %v396, %v444
        %v446 = vpop.f32.mrb[0].mxu0
        %v447 = vpop.f32.mrb[0].mxu0
        %v448 = vadd.f32 %v399, %v447
        %v449 = vpop.f32.mrb[0].mxu0
        %450 = vdwg.mxu0
        %v451 = vmul.f32 %v437, 0.007874016
        %v452 = vmul.f32 %v440, 0.007874016
        %v453 = vmul.f32 %v445, 0.007874016
        %v454 = vmul.f32 %v448, 0.007874016
        %v455 = vrsqrt.pop %v451
        %v456 = vmul.f32 %v451, %v455
        %vm457 = vcmp.eq.f32.partialorder %v451, inf
        %v458 = vsel %vm457, %v451, %v456
        %vm459 = vcmp.eq.f32.partialorder %v451, 0.0
        %v460 = vand.u32 %v451, 2147483648
        %v461 = vsel %vm459, %v460, %v458
        %v462 = vrsqrt.pop %v452
        %v463 = vmul.f32 %v452, %v462
        %vm464 = vcmp.eq.f32.partialorder %v452, inf
        %v465 = vsel %vm464, %v452, %v463
        %vm466 = vcmp.eq.f32.partialorder %v452, 0.0
        %v467 = vand.u32 %v452, 2147483648
        %v468 = vsel %vm466, %v467, %v465
        %v469 = vrsqrt.pop %v453
        %v470 = vmul.f32 %v453, %v469
        %vm471 = vcmp.eq.f32.partialorder %v453, inf
        %v472 = vsel %vm471, %v453, %v470
        %vm473 = vcmp.eq.f32.partialorder %v453, 0.0
        %v474 = vand.u32 %v453, 2147483648
        %v475 = vsel %vm473, %v474, %v472
        %v476 = vrsqrt.pop %v454
        %v477 = vmul.f32 %v454, %v476
        %vm478 = vcmp.eq.f32.partialorder %v454, inf
        %v479 = vsel %vm478, %v454, %v477
        %vm480 = vcmp.eq.f32.partialorder %v454, 0.0
        %v481 = vand.u32 %v454, 2147483648
        %v482 = vsel %vm480, %v481, %v479
        %v483 = vadd.f32 %v461, 1e-06
        %v484 = vadd.f32 %v468, 1e-06
        %v485 = vadd.f32 %v475, 1e-06
        %v486 = vadd.f32 %v482, 1e-06
        %v487 = vrcp.pop %v483
        %v488 = vrcp.pop %v484
        %v489 = vrcp.pop %v485
        %v490 = vrcp.pop %v486
        %492 = vset.pattern.permute.xlu0 0
        %493 = vperm.xlu0 %492, %v487
        %v494 = vpop.permute.xlu0 %493
        %497 = vset.pattern.permute.xlu0 0
        %498 = vperm.xlu0 %497, %v488
        %v499 = vpop.permute.xlu0 %498
        %502 = vset.pattern.permute.xlu0 0
        %503 = vperm.xlu0 %502, %v489
        %v504 = vpop.permute.xlu0 %503
        %507 = vset.pattern.permute.xlu0 0
        %508 = vperm.xlu0 %507, %v490
        %v509 = vpop.permute.xlu0 %508
        %v511 = vmul.f32 %v333, %v494
        %v512 = vmul.f32 %v334, %v499
        %v513 = vmul.f32 %v335, %v504
        %v514 = vmul.f32 %v336, %v509
        %v516 = vlaneseq
        %v517 = vshrl.u32 %v516, 7
        %v518 = vsub.s32 0, %v517
        %v519 = vrot.slane %v197, %v518
        %v521 = vmul.f32 %v511, %v519
        %v522 = vmul.f32 %v512, %v519
        %v523 = vmul.f32 %v513, %v519
        %v524 = vmul.f32 %v514, %v519
        %v526 = vlaneseq
        %v527 = vshrl.u32 %v526, 7
        %v528 = vsub.s32 0, %v527
        %v529 = vrot.slane %v198, %v528
        %v531 = vadd.f32 %v521, %v529
        %v532 = vadd.f32 %v522, %v529
        %v533 = vadd.f32 %v523, %v529
        %v534 = vadd.f32 %v524, %v529
        %535 = vst [vmem:[%s188] sm:$0xff] %v531
        %536 = vst [vmem:[%s188 + $0x8] sm:$0xff] %v532
        %537 = vst [vmem:[%s188 + $0x10] sm:$0xff] %v533
        %538 = vst [vmem:[%s188 + $0x18] sm:$0xff] %v534
        %s539 = sand.u32 %s96, 1
        %s540 = scalar_lea.sflag [#allocation4], %s539
        %s541 = sand.u32 %s96, 1
        %s542 = smul.addr %s541, 32
        %s543 = scalar_lea.vmem [#allocation5], %s542
        // Predicated region
        $region37: #{layer_norm.1} parent=31 // pred_check
          %p544 = pneg %p106
        $region38: #{layer_norm.1} parent=31 // pred_check_branch
          %546 = sbr.rel (%p544) target = $region40
        $region39: #{layer_norm.1} parent=31 // pred_region
          %s547 = smul.u32 4, %s20
          %s549 = ssub.s32 512, 512
          %550 = vsyncadd %s540, %s549
          %s551 = smul.addr %s547, 128
          %s552 = scalar_lea.hbm %s3, %s551
          %s553 = sshll.u32 %s543, 4
          %s554 = int_to_ptr.vmem [resolvable:$true] %s553
          %559 = dma.vmem_to_hbm [thread:$0]  %s554, 512, %s552, %s540, 128, 128, 8
        $region40: #{layer_norm.1} parent=31 // pred_fallthru
          _
      $region32: #{layer_norm.1} parent=5 // pred_fallthru
        _
      %p560 = scmp.le.s32.totalorder 2, %s15
      // Predicated region
      $region41: #{layer_norm.1} parent=5 // pred_check
        %p561 = pneg %p560
      $region42: #{layer_norm.1} parent=5 // pred_check_branch
        %563 = sbr.rel (%p561) target = $region44
      $region43: #{layer_norm.1} parent=5 // pred_region
        %s564 = ssub.s32 %s15, 2
        // Predicated region
        $region45: #{layer_norm.1} parent=43 // pred_check
          %p565 = pneg %p112
        $region46: #{layer_norm.1} parent=43 // pred_check_branch
          %567 = sbr.rel (%p565) target = $region48
        $region47: #{layer_norm.1} parent=43 // pred_region
          %s568 = sand.u32 %s97, 1
          %s569 = scalar_lea.sflag [#allocation4], %s568
          %s570 = sand.u32 %s97, 1
          %s571 = smul.addr %s570, 32
          %s572 = scalar_lea.vmem [#allocation5], %s571
          %573 = dma.done %s569, 512
        $region48: #{layer_norm.1} parent=43 // pred_fallthru
          _
      $region44: #{layer_norm.1} parent=5 // pred_fallthru
        _
    $region6: #{layer_norm.1} parent=1 // loop_footer
      %s19 = sadd.s32 1, %s15
    $region7: #{layer_norm.1} parent=1 // loop_footer_branch
      %14 = sbr.rel target = $region3
    $region8: #{layer_norm.1} parent=1 // loop_exit
      _
    %574 = vsyncpa [#allocation3], 1
    %s575 = scalar_lea.sflag [#allocation3], 1
    %576 = vsyncpa %s575, 1
    %577 = vsyncpa [#allocation4], 1
    %s578 = scalar_lea.sflag [#allocation4], 1
    %579 = vsyncpa %s578, 1

</llo_original>
